<compile_context>
chip_gen: v6e
topology: v6e:2x2x1
jax: 0.10.0
libtpu: 0.0.40
codegen_flags: <defaults>
</compile_context>

<pallas_src>
import jax
import jax.numpy as jnp
from jax.experimental import pallas as pl
from jax.experimental.pallas import tpu as pltpu


def _round_up(n, m):
    return ((n + m - 1) // m) * m


def mlp_kernel(xt_ref, w1t_ref, w2t_ref, b2_ref, w3_ref, b3_ref, o_ref):
    # xt: (8, TB) f32.  Rows 0..2 = x^T, row 3 = 1.0 (bias feed), rows 4..7 = 0.
    xt = xt_ref[...]

    # ---- Layer 1: tiny K=8 MXU pass; b1 is folded into column 3 of w1t. ----
    h = jnp.dot(w1t_ref[...], xt, preferred_element_type=jnp.float32)   # (256, TB)
    h = jnp.maximum(h, 0.0)

    # ---- Layer 2: bf16 MXU pass with f32 accumulation. ----
    h = jnp.dot(w2t_ref[...], h.astype(jnp.bfloat16),
                preferred_element_type=jnp.float32)                     # (256, TB)
    h = jnp.maximum(h + b2_ref[...], 0.0)

    # ---- Layer 3 (N=1): broadcast multiply + sublane reduction, no MXU. ----
    y = jnp.sum(h * w3_ref[...], axis=0, keepdims=True) + b3_ref[0, 0]  # (1, TB)

    # Lane-dense store: replicate across the 8 sublanes of the output block
    # (row 0 is the real result; the wrapper slices it out).
    o_ref[...] = jnp.broadcast_to(y, o_ref.shape).astype(o_ref.dtype)


def teste2_forward(x, params, *, tb=2048, core_parallel=False):
    """x: (B, 3) f32.  params: (w1 (3,256), b1 (1,256), w2 (256,256),
    b2 (1,256), w3 (256,1), b3 (1,1)).  Returns (B, 1) f32."""
    w1, b1, w2, b2, w3, b3 = params
    B = x.shape[0]
    H = w1.shape[1]  # 256

    # Batch tile: multiple of 128 lanes (sweepable: 1024/2048/4096);
    # tiny batches use a single lane-aligned tile.
    tb = _round_up(tb, 128)
    TB = min(tb, _round_up(B, 128))
    Bp = _round_up(B, TB)
    num_tiles = Bp // TB

    # Lane-dense, transposed, K-padded input (8, Bp):
    #   rows 0..2 = x^T, row 3 = 1.0 (feeds the folded b1), rows 4..7 = 0.
    xt = jnp.zeros((8, Bp), jnp.float32)
    xt = xt.at[:3, :B].set(x.T.astype(jnp.float32))
    xt = xt.at[3, :].set(1.0)

    # Layer-1 weights augmented with the bias column: (256, 8) = [w1^T | b1 | 0].
    w1t = jnp.zeros((H, 8), jnp.float32)
    w1t = w1t.at[:, :3].set(w1.T)
    w1t = w1t.at[:, 3].set(b1.reshape(H))

    w2t = w2.T.astype(jnp.bfloat16)              # (256, 256) bf16, VMEM-resident
    b2c = b2.reshape(H, 1).astype(jnp.float32)   # column bias for transposed form
    w3c = w3.reshape(H, 1).astype(jnp.float32)   # (256, 1) column
    b3s = b3.reshape(1, 1).astype(jnp.float32)   # scalar -> SMEM

    if core_parallel and num_tiles >= 2:
        # v7x: shard batch tiles across both TensorCores.
        dims = (pltpu.CORE_PARALLEL,)
    else:
        dims = (pltpu.PARALLEL,)

    out = pl.pallas_call(
        mlp_kernel,
        out_shape=jax.ShapeDtypeStruct((8, Bp), jnp.float32),
        grid=(num_tiles,),
        in_specs=[
            # Batch-tiled transposed input, pipelined across grid steps.
            pl.BlockSpec((8, TB), lambda i: (0, i)),
            # Weights / biases: same block every step -> VMEM-resident.
            pl.BlockSpec((H, 8), lambda i: (0, 0)),
            pl.BlockSpec((H, H), lambda i: (0, 0)),
            pl.BlockSpec((H, 1), lambda i: (0, 0)),
            pl.BlockSpec((H, 1), lambda i: (0, 0)),
            # Single-scalar bias lives in SMEM (no padded VMEM tile).
            pl.BlockSpec((1, 1), lambda i: (0, 0),
                         memory_space=pltpu.MemorySpace.SMEM),
        ],
        out_specs=pl.BlockSpec((8, TB), lambda i: (0, i)),
        compiler_params=pltpu.CompilerParams(dimension_semantics=dims),
    )(xt, w1t, w2t, b2c, w3c, b3s)

    return out[0, :B].reshape(B, 1)


def init_params(key):
    """Deterministic init mirroring nn.Linear shapes (stored as (in, out))."""
    ks = jax.random.split(key, 6)

    def linear(kw, kb, fan_in, fan_out):
        bound = 1.0 / jnp.sqrt(fan_in)
        w = jax.random.uniform(kw, (fan_in, fan_out), jnp.float32, -bound, bound)
        b = jax.random.uniform(kb, (1, fan_out), jnp.float32, -bound, bound)
        return w, b

    w1, b1 = linear(ks[0], ks[1], 3, 256)
    w2, b2 = linear(ks[2], ks[3], 256, 256)
    w3, b3 = linear(ks[4], ks[5], 256, 1)
    return (w1, b1, w2, b2, w3, b3)


def reference_forward(x, params):
    w1, b1, w2, b2, w3, b3 = params
    h = jnp.maximum(x @ w1 + b1, 0.0)
    h = jnp.maximum(h @ w2 + b2, 0.0)
    return h @ w3 + b3


if __name__ == "__main__":
    key = jax.random.PRNGKey(0)
    kx, kp = jax.random.split(key)
    B = 8
    x = jax.random.normal(kx, (B, 3), dtype=jnp.float32)
    params = init_params(kp)

    out = teste2_forward(x, params)
    jax.block_until_ready(out)

    ref = reference_forward(x, params)
    assert out.shape == (B, 1)
    # Layer 2 runs on the MXU in bf16 (f32 accumulation), so compare against
    # the f32 reference with a bf16-appropriate tolerance.
    assert jnp.allclose(out, ref, atol=1e-2, rtol=1e-2)
    print("KERNEL_OK")
</pallas_src>

<mosaic_0001>
module attributes {stable_mosaic.version = 11 : i64} {
  func.func @mlp_kernel(%arg0: i32, %arg1: memref<8x128xf32, #tpu.memory_space<vmem>>, %arg2: memref<256x8xf32, #tpu.memory_space<vmem>>, %arg3: memref<256x256xbf16, #tpu.memory_space<vmem>>, %arg4: memref<256x1xf32, #tpu.memory_space<vmem>>, %arg5: memref<256x1xf32, #tpu.memory_space<vmem>>, %arg6: memref<1x1xf32, #tpu.memory_space<smem>>, %arg7: memref<8x128xf32, #tpu.memory_space<vmem>>) attributes {dimension_semantics = [#tpu.dimension_semantics<parallel>], iteration_bounds = array<i64: 1>, scalar_prefetch = 0 : i64, scratch_operands = 0 : i64, tpu.core_type = #tpu.core_type<tc>, window_params = [{transform_indices = @transform_0, window_bounds = array<i64: 8, 128>}, {pipeline_mode = #tpu.pipeline_mode<synchronous>, transform_indices = @transform_1, window_bounds = array<i64: 256, 8>}, {pipeline_mode = #tpu.pipeline_mode<synchronous>, transform_indices = @transform_2, window_bounds = array<i64: 256, 256>}, {pipeline_mode = #tpu.pipeline_mode<synchronous>, transform_indices = @transform_3, window_bounds = array<i64: 256, 1>}, {pipeline_mode = #tpu.pipeline_mode<synchronous>, transform_indices = @transform_4, window_bounds = array<i64: 256, 1>}, {transform_indices = @transform_5, window_bounds = array<i64: 1, 1>}, {transform_indices = @transform_6, window_bounds = array<i64: 8, 128>}]} {
    %c0 = arith.constant 0 : index
    %c0_0 = arith.constant 0 : index
    %0 = vector.load %arg1[%c0, %c0_0] : memref<8x128xf32, #tpu.memory_space<vmem>>, vector<8x128xf32>
    %c0_1 = arith.constant 0 : index
    %c0_2 = arith.constant 0 : index
    %1 = vector.load %arg2[%c0_1, %c0_2] : memref<256x8xf32, #tpu.memory_space<vmem>>, vector<256x8xf32>
    %cst = arith.constant dense<0.000000e+00> : vector<256x128xf32>
    %2 = tpu.matmul %1, %0, %cst {dimension_numbers = #tpu.dot_dimension_numbers<[1], [0], [0], [1], [0, 0, 1, 1], [], []>} : vector<256x8xf32>, vector<8x128xf32>, vector<256x128xf32> -> vector<256x128xf32>
    %cst_3 = arith.constant 0.000000e+00 : f32
    %3 = vector.broadcast %cst_3 : f32 to vector<256x128xf32>
    %4 = arith.maximumf %2, %3 : vector<256x128xf32>
    %c0_4 = arith.constant 0 : index
    %c0_5 = arith.constant 0 : index
    %5 = vector.load %arg3[%c0_4, %c0_5] : memref<256x256xbf16, #tpu.memory_space<vmem>>, vector<256x256xbf16>
    %6 = arith.truncf %4 : vector<256x128xf32> to vector<256x128xbf16>
    %cst_6 = arith.constant dense<0.000000e+00> : vector<256x128xf32>
    %7 = tpu.matmul %5, %6, %cst_6 {dimension_numbers = #tpu.dot_dimension_numbers<[1], [0], [0], [1], [0, 0, 1, 1], [], []>} : vector<256x256xbf16>, vector<256x128xbf16>, vector<256x128xf32> -> vector<256x128xf32>
    %c0_7 = arith.constant 0 : index
    %c0_8 = arith.constant 0 : index
    %8 = vector.load %arg4[%c0_7, %c0_8] : memref<256x1xf32, #tpu.memory_space<vmem>>, vector<256x1xf32>
    %9 = vector.broadcast %8 : vector<256x1xf32> to vector<256x128xf32>
    %10 = arith.addf %7, %9 : vector<256x128xf32>
    %cst_9 = arith.constant 0.000000e+00 : f32
    %11 = vector.broadcast %cst_9 : f32 to vector<256x128xf32>
    %12 = arith.maximumf %10, %11 : vector<256x128xf32>
    %c0_10 = arith.constant 0 : index
    %c0_11 = arith.constant 0 : index
    %13 = vector.load %arg5[%c0_10, %c0_11] : memref<256x1xf32, #tpu.memory_space<vmem>>, vector<256x1xf32>
    %14 = vector.broadcast %13 : vector<256x1xf32> to vector<256x128xf32>
    %15 = arith.mulf %12, %14 : vector<256x128xf32>
    %cst_12 = arith.constant dense<0.000000e+00> : vector<128xf32>
    %16 = vector.multi_reduction <add>, %15, %cst_12 [0] : vector<256x128xf32> to vector<128xf32>
    %17 = vector.shape_cast %16 : vector<128xf32> to vector<1x128xf32>
    %c0_13 = arith.constant 0 : index
    %c0_14 = arith.constant 0 : index
    %18 = memref.load %arg6[%c0_13, %c0_14] : memref<1x1xf32, #tpu.memory_space<smem>>
    %19 = vector.broadcast %18 : f32 to vector<1x128xf32>
    %20 = arith.addf %17, %19 : vector<1x128xf32>
    %21 = vector.shape_cast %20 : vector<1x128xf32> to vector<1x128xf32>
    %22 = vector.broadcast %21 : vector<1x128xf32> to vector<8x128xf32>
    %c0_15 = arith.constant 0 : index
    %c0_16 = arith.constant 0 : index
    %23 = vector.load %arg7[%c0_15, %c0_16] : memref<8x128xf32, #tpu.memory_space<vmem>>, vector<8x128xf32>
    tpu.vector_store %arg7[%c0_15, %c0_16], %22 {strides = array<i32>} : memref<8x128xf32, #tpu.memory_space<vmem>>, vector<8x128xf32>,
    return
  }
  func.func @transform_0(%arg0: i32) -> (i32, i32) {
    %c0_i32 = arith.constant 0 : i32
    %c0_i32_0 = arith.constant 0 : i32
    return %c0_i32, %arg0 : i32, i32
  }
  func.func @transform_1(%arg0: i32) -> (i32, i32) {
    %c0_i32 = arith.constant 0 : i32
    %c0_i32_0 = arith.constant 0 : i32
    %c0_i32_1 = arith.constant 0 : i32
    return %c0_i32, %c0_i32_0 : i32, i32
  }
  func.func @transform_2(%arg0: i32) -> (i32, i32) {
    %c0_i32 = arith.constant 0 : i32
    %c0_i32_0 = arith.constant 0 : i32
    %c0_i32_1 = arith.constant 0 : i32
    return %c0_i32, %c0_i32_0 : i32, i32
  }
  func.func @transform_3(%arg0: i32) -> (i32, i32) {
    %c0_i32 = arith.constant 0 : i32
    %c0_i32_0 = arith.constant 0 : i32
    %c0_i32_1 = arith.constant 0 : i32
    return %c0_i32, %c0_i32_0 : i32, i32
  }
  func.func @transform_4(%arg0: i32) -> (i32, i32) {
    %c0_i32 = arith.constant 0 : i32
    %c0_i32_0 = arith.constant 0 : i32
    %c0_i32_1 = arith.constant 0 : i32
    return %c0_i32, %c0_i32_0 : i32, i32
  }
  func.func @transform_5(%arg0: i32) -> (i32, i32) {
    %c0_i32 = arith.constant 0 : i32
    %c0_i32_0 = arith.constant 0 : i32
    %c0_i32_1 = arith.constant 0 : i32
    return %c0_i32, %c0_i32_0 : i32, i32
  }
  func.func @transform_6(%arg0: i32) -> (i32, i32) {
    %c0_i32 = arith.constant 0 : i32
    %c0_i32_0 = arith.constant 0 : i32
    return %c0_i32, %arg0 : i32, i32
  }
}

</mosaic_0001>

<llo_original>
// kernel: tpu_custom_call.1
$region0: #{tpu_custom_call.1}
  #allocation0 [shape = 'u32[]', space=smem, size = 0x4, offset = 0x4, fixed_abs, tag = 'smem constant byte address 0x4 - core index']
  #allocation1 [shape = 'u32[144,128]{1,0:T(1,128)}', space=vmem, size = 0x12000, scoped, tag = 'internal scratch']
  #allocation2 [shape = 'f32[1,1]{1,0:T(1,128)S(6)}', space=smem, size = 0x200, scoped, tag = 'scoped memory for tpu_custom_call.1']
  %s0 = inlined_call_operand.vmem [shape: f32[8,128], index: 0, kind: input, shape index: {}]
  %s1 = inlined_call_operand.vmem [shape: f32[256,8], index: 1, kind: input, shape index: {}]
  %s2 = inlined_call_operand.vmem [shape: bf16[256,256], index: 2, kind: input, shape index: {}]
  %s3 = inlined_call_operand.vmem [shape: f32[256,1], index: 3, kind: input, shape index: {}]
  %s4 = inlined_call_operand.vmem [shape: f32[256,1], index: 4, kind: input, shape index: {}]
  %s5 = inlined_call_operand.<no memory space> [shape: f32[1,1], index: 5, kind: input, shape index: {}]
  %s6 = inlined_call_operand.hbm [shape: f32[8,128], index: 6, kind: output, shape index: {}]
  %s7 = sld [smem:[#allocation0]]
  $region34: #{tpu_custom_call.1} parent=0
    _
  %s9 = ssub.s32 1, %s7
  %s10 = scalar_select 0, %s9, %s7
  %11 = sst [smem:[#allocation2]] %s5
  $region1: #{tpu_custom_call.1} parent=0
    #allocation3 [shape = 'u8[4096]{0}', space=vmem, size = 0x1000, scoped, tag = 'output window, operand 0, single buffered']
    #allocation4 [shape = 's32[1]{0}', space=sflag, size = 0x4, scoped, tag = 'scoped memory for tpu_custom_call.1']
    %12 = vsyncpa [#allocation4], 0
    // Predicated region
    $region2: #{tpu_custom_call.1} parent=1 // pred_check
      _
    $region3: #{tpu_custom_call.1} parent=1 // pred_check_branch
      %14 = sbr.rel (0) target = $region5
    $region4: #{tpu_custom_call.1} parent=1 // pred_region
      _
    $region5: #{tpu_custom_call.1} parent=1 // pred_fallthru
      _
    // Predicated region
    $region6: #{tpu_custom_call.1} parent=1 // pred_check
      _
    $region7: #{tpu_custom_call.1} parent=1 // pred_check_branch
      %16 = sbr.rel (0) target = $region9
    $region8: #{tpu_custom_call.1} parent=1 // pred_region
      _
    $region9: #{tpu_custom_call.1} parent=1 // pred_fallthru
      _
    // Predicated region
    $region10: #{tpu_custom_call.1} parent=1 // pred_check
      _
    $region11: #{tpu_custom_call.1} parent=1 // pred_check_branch
      %18 = sbr.rel (0) target = $region13
    $region12: #{tpu_custom_call.1} parent=1 // pred_region
      _
    $region13: #{tpu_custom_call.1} parent=1 // pred_fallthru
      _
    // Predicated region
    $region14: #{tpu_custom_call.1} parent=1 // pred_check
      _
    $region15: #{tpu_custom_call.1} parent=1 // pred_check_branch
      %20 = sbr.rel (0) target = $region17
    $region16: #{tpu_custom_call.1} parent=1 // pred_region
      _
    $region17: #{tpu_custom_call.1} parent=1 // pred_fallthru
      _
    // Predicated region
    $region18: #{tpu_custom_call.1} parent=1 // pred_check
      _
    $region19: #{tpu_custom_call.1} parent=1 // pred_check_branch
      %22 = sbr.rel (0) target = $region21
    $region20: #{tpu_custom_call.1} parent=1 // pred_region
      _
    $region21: #{tpu_custom_call.1} parent=1 // pred_fallthru
      _
    // Predicated region
    $region22: #{tpu_custom_call.1} parent=1 // pred_check
      _
    $region23: #{tpu_custom_call.1} parent=1 // pred_check_branch
      %24 = sbr.rel (0) target = $region25
    $region24: #{tpu_custom_call.1} parent=1 // pred_region
      _
    $region25: #{tpu_custom_call.1} parent=1 // pred_fallthru
      _
    %v26 = vld [vmem:[%s0] sm:$0xff]
    %v27 = vld [vmem:[%s1] sm:$0xff]
    %v28 = vld [vmem:[%s1 + $0x8] sm:$0xff]
    %v29 = vld [vmem:[%s1 + $0x10] sm:$0xff]
    %v30 = vld [vmem:[%s1 + $0x18] sm:$0xff]
    %v31 = vld [vmem:[%s1 + $0x20] sm:$0xff]
    %v32 = vld [vmem:[%s1 + $0x28] sm:$0xff]
    %v33 = vld [vmem:[%s1 + $0x30] sm:$0xff]
    %v34 = vld [vmem:[%s1 + $0x38] sm:$0xff]
    %v35 = vld [vmem:[%s1 + $0x40] sm:$0xff]
    %v36 = vld [vmem:[%s1 + $0x48] sm:$0xff]
    %v37 = vld [vmem:[%s1 + $0x50] sm:$0xff]
    %v38 = vld [vmem:[%s1 + $0x58] sm:$0xff]
    %v39 = vld [vmem:[%s1 + $0x60] sm:$0xff]
    %v40 = vld [vmem:[%s1 + $0x68] sm:$0xff]
    %v41 = vld [vmem:[%s1 + $0x70] sm:$0xff]
    %v42 = vld [vmem:[%s1 + $0x78] sm:$0xff]
    %v43 = vld [vmem:[%s1 + $0x80] sm:$0xff]
    %v44 = vld [vmem:[%s1 + $0x88] sm:$0xff]
    %v45 = vld [vmem:[%s1 + $0x90] sm:$0xff]
    %v46 = vld [vmem:[%s1 + $0x98] sm:$0xff]
    %v47 = vld [vmem:[%s1 + $0xa0] sm:$0xff]
    %v48 = vld [vmem:[%s1 + $0xa8] sm:$0xff]
    %v49 = vld [vmem:[%s1 + $0xb0] sm:$0xff]
    %v50 = vld [vmem:[%s1 + $0xb8] sm:$0xff]
    %v51 = vld [vmem:[%s1 + $0xc0] sm:$0xff]
    %v52 = vld [vmem:[%s1 + $0xc8] sm:$0xff]
    %v53 = vld [vmem:[%s1 + $0xd0] sm:$0xff]
    %v54 = vld [vmem:[%s1 + $0xd8] sm:$0xff]
    %v55 = vld [vmem:[%s1 + $0xe0] sm:$0xff]
    %v56 = vld [vmem:[%s1 + $0xe8] sm:$0xff]
    %v57 = vld [vmem:[%s1 + $0xf0] sm:$0xff]
    %v58 = vld [vmem:[%s1 + $0xf8] sm:$0xff]
    %vm59 = vcmask 64512
    %v61 = vsel %vm59, %v27, 0
    %v64 = vsel %vm59, %v28, 0
    %v67 = vsel %vm59, %v29, 0
    %v70 = vsel %vm59, %v30, 0
    %v73 = vsel %vm59, %v31, 0
    %v76 = vsel %vm59, %v32, 0
    %v79 = vsel %vm59, %v33, 0
    %v82 = vsel %vm59, %v34, 0
    %v85 = vsel %vm59, %v35, 0
    %v88 = vsel %vm59, %v36, 0
    %v91 = vsel %vm59, %v37, 0
    %v94 = vsel %vm59, %v38, 0
    %v97 = vsel %vm59, %v39, 0
    %v100 = vsel %vm59, %v40, 0
    %v103 = vsel %vm59, %v41, 0
    %v106 = vsel %vm59, %v42, 0
    %v109 = vsel %vm59, %v43, 0
    %v112 = vsel %vm59, %v44, 0
    %v115 = vsel %vm59, %v45, 0
    %v118 = vsel %vm59, %v46, 0
    %v121 = vsel %vm59, %v47, 0
    %v124 = vsel %vm59, %v48, 0
    %v127 = vsel %vm59, %v49, 0
    %v130 = vsel %vm59, %v50, 0
    %v133 = vsel %vm59, %v51, 0
    %v136 = vsel %vm59, %v52, 0
    %v139 = vsel %vm59, %v53, 0
    %v142 = vsel %vm59, %v54, 0
    %v145 = vsel %vm59, %v55, 0
    %v148 = vsel %vm59, %v56, 0
    %v151 = vsel %vm59, %v57, 0
    %v154 = vsel %vm59, %v58, 0
    %156 = vmatprep.subr.mxu0 0.0
    %157 = vmatpush1.msra.mxu0 0.0
    %158 = vmatprep.subr.mxu0 0.0
    %159 = vmatpush1.msra.mxu0 0.0
    %160 = vmatprep.subr.mxu0 0.0
    %161 = vmatpush1.msra.mxu0 0.0
    %162 = vmatprep.subr.mxu0 0.0
    %163 = vmatpush1.msra.mxu0 0.0
    %164 = vmatprep.subr.mxu0 0.0
    %165 = vmatpush1.msra.mxu0 0.0
    %166 = vmatprep.subr.mxu0 0.0
    %167 = vmatpush1.msra.mxu0 0.0
    %168 = vmatprep.subr.mxu0 0.0
    %169 = vmatpush1.msra.mxu0 0.0
    %170 = vmatprep.subr.mxu0 0.0
    %171 = vmatpush1.msra.mxu0 0.0
    %172 = vmatprep.subr.mxu0 0.0
    %173 = vmatpush1.msra.mxu0 0.0
    %174 = vmatprep.subr.mxu0 0.0
    %175 = vmatpush1.msra.mxu0 0.0
    %176 = vmatprep.subr.mxu0 0.0
    %177 = vmatpush1.msra.mxu0 0.0
    %178 = vmatprep.subr.mxu0 0.0
    %179 = vmatpush1.msra.mxu0 0.0
    %180 = vmatprep.subr.mxu0 0.0
    %181 = vmatpush1.msra.mxu0 0.0
    %182 = vmatprep.subr.mxu0 0.0
    %183 = vmatpush1.msra.mxu0 0.0
    %184 = vmatprep.subr.mxu0 0.0
    %185 = vmatpush1.msra.mxu0 0.0
    %186 = vmatprep.subr.mxu0 0.0
    %187 = vmatpush1.msra.mxu0 %v26
    %188 = vmatprep.subr.mxu0 0.0
    %189 = vmatpush2.msra.mxu0 0.0
    %190 = vmatprep.subr.mxu0 0.0
    %191 = vmatpush2.msra.mxu0 0.0
    %192 = vmatprep.subr.mxu0 0.0
    %193 = vmatpush2.msra.mxu0 0.0
    %194 = vmatprep.subr.mxu0 0.0
    %195 = vmatpush2.msra.mxu0 0.0
    %196 = vmatprep.subr.mxu0 0.0
    %197 = vmatpush2.msra.mxu0 0.0
    %198 = vmatprep.subr.mxu0 0.0
    %199 = vmatpush2.msra.mxu0 0.0
    %200 = vmatprep.subr.mxu0 0.0
    %201 = vmatpush2.msra.mxu0 0.0
    %202 = vmatprep.subr.mxu0 0.0
    %203 = vmatpush2.msra.mxu0 0.0
    %204 = vmatprep.subr.mxu0 0.0
    %205 = vmatpush2.msra.mxu0 0.0
    %206 = vmatprep.subr.mxu0 0.0
    %207 = vmatpush2.msra.mxu0 0.0
    %208 = vmatprep.subr.mxu0 0.0
    %209 = vmatpush2.msra.mxu0 0.0
    %210 = vmatprep.subr.mxu0 0.0
    %211 = vmatpush2.msra.mxu0 0.0
    %212 = vmatprep.subr.mxu0 0.0
    %213 = vmatpush2.msra.mxu0 0.0
    %214 = vmatprep.subr.mxu0 0.0
    %215 = vmatpush2.msra.mxu0 0.0
    %216 = vmatprep.subr.mxu0 0.0
    %217 = vmatpush2.msra.mxu0 0.0
    %218 = vmatprep.subr.mxu0 0.0
    %219 = vmatpush2.msra.mxu0 0.0
    %220 = vmatprep.mubr.f32.mxu0 0.0
    %221 = vmatmul.mubr.f32.gmra.mxu0 %v61
    %v222 = vpop.f32.mrf.mxu0
    %v223 = vadd.f32 0.0, %v222
    %v224 = vpop.f32.mrf.mxu0
    %225 = vmatprep.mubr.f32.mxu0 0.0
    %226 = vmatmul.mubr.f32.gmra.mxu0 %v64
    %v227 = vpop.f32.mrf.mxu0
    %v228 = vadd.f32 0.0, %v227
    %v229 = vpop.f32.mrf.mxu0
    %230 = vmatprep.mubr.f32.mxu0 0.0
    %231 = vmatmul.mubr.f32.gmra.mxu0 %v67
    %v232 = vpop.f32.mrf.mxu0
    %v233 = vadd.f32 0.0, %v232
    %v234 = vpop.f32.mrf.mxu0
    %235 = vmatprep.mubr.f32.mxu0 0.0
    %236 = vmatmul.mubr.f32.gmra.mxu0 %v70
    %v237 = vpop.f32.mrf.mxu0
    %v238 = vadd.f32 0.0, %v237
    %v239 = vpop.f32.mrf.mxu0
    %240 = vmatprep.mubr.f32.mxu0 0.0
    %241 = vmatmul.mubr.f32.gmra.mxu0 %v73
    %v242 = vpop.f32.mrf.mxu0
    %v243 = vadd.f32 0.0, %v242
    %v244 = vpop.f32.mrf.mxu0
    %245 = vmatprep.mubr.f32.mxu0 0.0
    %246 = vmatmul.mubr.f32.gmra.mxu0 %v76
    %v247 = vpop.f32.mrf.mxu0
    %v248 = vadd.f32 0.0, %v247
    %v249 = vpop.f32.mrf.mxu0
    %250 = vmatprep.mubr.f32.mxu0 0.0
    %251 = vmatmul.mubr.f32.gmra.mxu0 %v79
    %v252 = vpop.f32.mrf.mxu0
    %v253 = vadd.f32 0.0, %v252
    %v254 = vpop.f32.mrf.mxu0
    %255 = vmatprep.mubr.f32.mxu0 0.0
    %256 = vmatmul.mubr.f32.gmra.mxu0 %v82
    %v257 = vpop.f32.mrf.mxu0
    %v258 = vadd.f32 0.0, %v257
    %v259 = vpop.f32.mrf.mxu0
    %260 = vmatprep.mubr.f32.mxu0 0.0
    %261 = vmatmul.mubr.f32.gmra.mxu0 %v85
    %v262 = vpop.f32.mrf.mxu0
    %v263 = vadd.f32 0.0, %v262
    %v264 = vpop.f32.mrf.mxu0
    %265 = vmatprep.mubr.f32.mxu0 0.0
    %266 = vmatmul.mubr.f32.gmra.mxu0 %v88
    %v267 = vpop.f32.mrf.mxu0
    %v268 = vadd.f32 0.0, %v267
    %v269 = vpop.f32.mrf.mxu0
    %270 = vmatprep.mubr.f32.mxu0 0.0
    %271 = vmatmul.mubr.f32.gmra.mxu0 %v91
    %v272 = vpop.f32.mrf.mxu0
    %v273 = vadd.f32 0.0, %v272
    %v274 = vpop.f32.mrf.mxu0
    %275 = vmatprep.mubr.f32.mxu0 0.0
    %276 = vmatmul.mubr.f32.gmra.mxu0 %v94
    %v277 = vpop.f32.mrf.mxu0
    %v278 = vadd.f32 0.0, %v277
    %v279 = vpop.f32.mrf.mxu0
    %280 = vmatprep.mubr.f32.mxu0 0.0
    %281 = vmatmul.mubr.f32.gmra.mxu0 %v97
    %v282 = vpop.f32.mrf.mxu0
    %v283 = vadd.f32 0.0, %v282
    %v284 = vpop.f32.mrf.mxu0
    %285 = vmatprep.mubr.f32.mxu0 0.0
    %286 = vmatmul.mubr.f32.gmra.mxu0 %v100
    %v287 = vpop.f32.mrf.mxu0
    %v288 = vadd.f32 0.0, %v287
    %v289 = vpop.f32.mrf.mxu0
    %290 = vmatprep.mubr.f32.mxu0 0.0
    %291 = vmatmul.mubr.f32.gmra.mxu0 %v103
    %v292 = vpop.f32.mrf.mxu0
    %v293 = vadd.f32 0.0, %v292
    %v294 = vpop.f32.mrf.mxu0
    %295 = vmatprep.mubr.f32.mxu0 0.0
    %296 = vmatmul.mubr.f32.gmra.mxu0 %v106
    %v297 = vpop.f32.mrf.mxu0
    %v298 = vadd.f32 0.0, %v297
    %v299 = vpop.f32.mrf.mxu0
    %300 = vmatprep.mubr.f32.mxu0 0.0
    %301 = vmatmul.mubr.f32.gmra.mxu0 %v109
    %v302 = vpop.f32.mrf.mxu0
    %v303 = vadd.f32 0.0, %v302
    %v304 = vpop.f32.mrf.mxu0
    %305 = vmatprep.mubr.f32.mxu0 0.0
    %306 = vmatmul.mubr.f32.gmra.mxu0 %v112
    %v307 = vpop.f32.mrf.mxu0
    %v308 = vadd.f32 0.0, %v307
    %v309 = vpop.f32.mrf.mxu0
    %310 = vmatprep.mubr.f32.mxu0 0.0
    %311 = vmatmul.mubr.f32.gmra.mxu0 %v115
    %v312 = vpop.f32.mrf.mxu0
    %v313 = vadd.f32 0.0, %v312
    %v314 = vpop.f32.mrf.mxu0
    %315 = vmatprep.mubr.f32.mxu0 0.0
    %316 = vmatmul.mubr.f32.gmra.mxu0 %v118
    %v317 = vpop.f32.mrf.mxu0
    %v318 = vadd.f32 0.0, %v317
    %v319 = vpop.f32.mrf.mxu0
    %320 = vmatprep.mubr.f32.mxu0 0.0
    %321 = vmatmul.mubr.f32.gmra.mxu0 %v121
    %v322 = vpop.f32.mrf.mxu0
    %v323 = vadd.f32 0.0, %v322
    %v324 = vpop.f32.mrf.mxu0
    %325 = vmatprep.mubr.f32.mxu0 0.0
    %326 = vmatmul.mubr.f32.gmra.mxu0 %v124
    %v327 = vpop.f32.mrf.mxu0
    %v328 = vadd.f32 0.0, %v327
    %v329 = vpop.f32.mrf.mxu0
    %330 = vmatprep.mubr.f32.mxu0 0.0
    %331 = vmatmul.mubr.f32.gmra.mxu0 %v127
    %v332 = vpop.f32.mrf.mxu0
    %v333 = vadd.f32 0.0, %v332
    %v334 = vpop.f32.mrf.mxu0
    %335 = vmatprep.mubr.f32.mxu0 0.0
    %336 = vmatmul.mubr.f32.gmra.mxu0 %v130
    %v337 = vpop.f32.mrf.mxu0
    %v338 = vadd.f32 0.0, %v337
    %v339 = vpop.f32.mrf.mxu0
    %340 = vmatprep.mubr.f32.mxu0 0.0
    %341 = vmatmul.mubr.f32.gmra.mxu0 %v133
    %v342 = vpop.f32.mrf.mxu0
    %v343 = vadd.f32 0.0, %v342
    %v344 = vpop.f32.mrf.mxu0
    %345 = vmatprep.mubr.f32.mxu0 0.0
    %346 = vmatmul.mubr.f32.gmra.mxu0 %v136
    %v347 = vpop.f32.mrf.mxu0
    %v348 = vadd.f32 0.0, %v347
    %v349 = vpop.f32.mrf.mxu0
    %350 = vmatprep.mubr.f32.mxu0 0.0
    %351 = vmatmul.mubr.f32.gmra.mxu0 %v139
    %v352 = vpop.f32.mrf.mxu0
    %v353 = vadd.f32 0.0, %v352
    %v354 = vpop.f32.mrf.mxu0
    %355 = vmatprep.mubr.f32.mxu0 0.0
    %356 = vmatmul.mubr.f32.gmra.mxu0 %v142
    %v357 = vpop.f32.mrf.mxu0
    %v358 = vadd.f32 0.0, %v357
    %v359 = vpop.f32.mrf.mxu0
    %360 = vmatprep.mubr.f32.mxu0 0.0
    %361 = vmatmul.mubr.f32.gmra.mxu0 %v145
    %v362 = vpop.f32.mrf.mxu0
    %v363 = vadd.f32 0.0, %v362
    %v364 = vpop.f32.mrf.mxu0
    %365 = vmatprep.mubr.f32.mxu0 0.0
    %366 = vmatmul.mubr.f32.gmra.mxu0 %v148
    %v367 = vpop.f32.mrf.mxu0
    %v368 = vadd.f32 0.0, %v367
    %v369 = vpop.f32.mrf.mxu0
    %370 = vmatprep.mubr.f32.mxu0 0.0
    %371 = vmatmul.mubr.f32.gmra.mxu0 %v151
    %v372 = vpop.f32.mrf.mxu0
    %v373 = vadd.f32 0.0, %v372
    %v374 = vpop.f32.mrf.mxu0
    %375 = vmatprep.mubr.f32.mxu0 0.0
    %376 = vmatmul.mubr.f32.gmra.mxu0 %v154
    %v377 = vpop.f32.mrf.mxu0
    %v378 = vadd.f32 0.0, %v377
    %v379 = vpop.f32.mrf.mxu0
    %380 = vdwg.mxu0
    %v381 = vmax.f32 %v223, 0.0
    %v382 = vmax.f32 %v228, 0.0
    %v383 = vmax.f32 %v233, 0.0
    %v384 = vmax.f32 %v238, 0.0
    %v385 = vmax.f32 %v243, 0.0
    %v386 = vmax.f32 %v248, 0.0
    %v387 = vmax.f32 %v253, 0.0
    %v388 = vmax.f32 %v258, 0.0
    %v389 = vmax.f32 %v263, 0.0
    %v390 = vmax.f32 %v268, 0.0
    %v391 = vmax.f32 %v273, 0.0
    %v392 = vmax.f32 %v278, 0.0
    %v393 = vmax.f32 %v283, 0.0
    %v394 = vmax.f32 %v288, 0.0
    %v395 = vmax.f32 %v293, 0.0
    %v396 = vmax.f32 %v298, 0.0
    %v397 = vmax.f32 %v303, 0.0
    %v398 = vmax.f32 %v308, 0.0
    %v399 = vmax.f32 %v313, 0.0
    %v400 = vmax.f32 %v318, 0.0
    %v401 = vmax.f32 %v323, 0.0
    %v402 = vmax.f32 %v328, 0.0
    %v403 = vmax.f32 %v333, 0.0
    %v404 = vmax.f32 %v338, 0.0
    %v405 = vmax.f32 %v343, 0.0
    %v406 = vmax.f32 %v348, 0.0
    %v407 = vmax.f32 %v353, 0.0
    %v408 = vmax.f32 %v358, 0.0
    %v409 = vmax.f32 %v363, 0.0
    %v410 = vmax.f32 %v368, 0.0
    %v411 = vmax.f32 %v373, 0.0
    %v412 = vmax.f32 %v378, 0.0
    %v413 = vld [vmem:[%s2] sm:$0xff]
    %v414 = vld [vmem:[%s2 + $0x8] sm:$0xff]
    %v415 = vld [vmem:[%s2 + $0x10] sm:$0xff]
    %v416 = vld [vmem:[%s2 + $0x18] sm:$0xff]
    %v417 = vld [vmem:[%s2 + $0x20] sm:$0xff]
    %v418 = vld [vmem:[%s2 + $0x28] sm:$0xff]
    %v419 = vld [vmem:[%s2 + $0x30] sm:$0xff]
    %v420 = vld [vmem:[%s2 + $0x38] sm:$0xff]
    %v421 = vld [vmem:[%s2 + $0x40] sm:$0xff]
    %v422 = vld [vmem:[%s2 + $0x48] sm:$0xff]
    %v423 = vld [vmem:[%s2 + $0x50] sm:$0xff]
    %v424 = vld [vmem:[%s2 + $0x58] sm:$0xff]
    %v425 = vld [vmem:[%s2 + $0x60] sm:$0xff]
    %v426 = vld [vmem:[%s2 + $0x68] sm:$0xff]
    %v427 = vld [vmem:[%s2 + $0x70] sm:$0xff]
    %v428 = vld [vmem:[%s2 + $0x78] sm:$0xff]
    %v429 = vld [vmem:[%s2 + $0x80] sm:$0xff]
    %v430 = vld [vmem:[%s2 + $0x88] sm:$0xff]
    %v431 = vld [vmem:[%s2 + $0x90] sm:$0xff]
    %v432 = vld [vmem:[%s2 + $0x98] sm:$0xff]
    %v433 = vld [vmem:[%s2 + $0xa0] sm:$0xff]
    %v434 = vld [vmem:[%s2 + $0xa8] sm:$0xff]
    %v435 = vld [vmem:[%s2 + $0xb0] sm:$0xff]
    %v436 = vld [vmem:[%s2 + $0xb8] sm:$0xff]
    %v437 = vld [vmem:[%s2 + $0xc0] sm:$0xff]
    %v438 = vld [vmem:[%s2 + $0xc8] sm:$0xff]
    %v439 = vld [vmem:[%s2 + $0xd0] sm:$0xff]
    %v440 = vld [vmem:[%s2 + $0xd8] sm:$0xff]
    %v441 = vld [vmem:[%s2 + $0xe0] sm:$0xff]
    %v442 = vld [vmem:[%s2 + $0xe8] sm:$0xff]
    %v443 = vld [vmem:[%s2 + $0xf0] sm:$0xff]
    %v444 = vld [vmem:[%s2 + $0xf8] sm:$0xff]
    %v445 = vpack.c.bf16 %v382, %v381
    %v446 = vpack.c.bf16 %v384, %v383
    %v447 = vpack.c.bf16 %v386, %v385
    %v448 = vpack.c.bf16 %v388, %v387
    %v449 = vpack.c.bf16 %v390, %v389
    %v450 = vpack.c.bf16 %v392, %v391
    %v451 = vpack.c.bf16 %v394, %v393
    %v452 = vpack.c.bf16 %v396, %v395
    %v453 = vpack.c.bf16 %v398, %v397
    %v454 = vpack.c.bf16 %v400, %v399
    %v455 = vpack.c.bf16 %v402, %v401
    %v456 = vpack.c.bf16 %v404, %v403
    %v457 = vpack.c.bf16 %v406, %v405
    %v458 = vpack.c.bf16 %v408, %v407
    %v459 = vpack.c.bf16 %v410, %v409
    %v460 = vpack.c.bf16 %v412, %v411
    %v461 = vld [vmem:[%s3] sm:$0xff]
    %v462 = vld [vmem:[%s3 + $0x8] sm:$0xff]
    %v463 = vld [vmem:[%s3 + $0x10] sm:$0xff]
    %v464 = vld [vmem:[%s3 + $0x18] sm:$0xff]
    %v465 = vld [vmem:[%s3 + $0x20] sm:$0xff]
    %v466 = vld [vmem:[%s3 + $0x28] sm:$0xff]
    %v467 = vld [vmem:[%s3 + $0x30] sm:$0xff]
    %v468 = vld [vmem:[%s3 + $0x38] sm:$0xff]
    %v469 = vld [vmem:[%s3 + $0x40] sm:$0xff]
    %v470 = vld [vmem:[%s3 + $0x48] sm:$0xff]
    %v471 = vld [vmem:[%s3 + $0x50] sm:$0xff]
    %v472 = vld [vmem:[%s3 + $0x58] sm:$0xff]
    %v473 = vld [vmem:[%s3 + $0x60] sm:$0xff]
    %v474 = vld [vmem:[%s3 + $0x68] sm:$0xff]
    %v475 = vld [vmem:[%s3 + $0x70] sm:$0xff]
    %v476 = vld [vmem:[%s3 + $0x78] sm:$0xff]
    %v477 = vld [vmem:[%s3 + $0x80] sm:$0xff]
    %v478 = vld [vmem:[%s3 + $0x88] sm:$0xff]
    %v479 = vld [vmem:[%s3 + $0x90] sm:$0xff]
    %v480 = vld [vmem:[%s3 + $0x98] sm:$0xff]
    %v481 = vld [vmem:[%s3 + $0xa0] sm:$0xff]
    %v482 = vld [vmem:[%s3 + $0xa8] sm:$0xff]
    %v483 = vld [vmem:[%s3 + $0xb0] sm:$0xff]
    %v484 = vld [vmem:[%s3 + $0xb8] sm:$0xff]
    %v485 = vld [vmem:[%s3 + $0xc0] sm:$0xff]
    %v486 = vld [vmem:[%s3 + $0xc8] sm:$0xff]
    %v487 = vld [vmem:[%s3 + $0xd0] sm:$0xff]
    %v488 = vld [vmem:[%s3 + $0xd8] sm:$0xff]
    %v489 = vld [vmem:[%s3 + $0xe0] sm:$0xff]
    %v490 = vld [vmem:[%s3 + $0xe8] sm:$0xff]
    %v491 = vld [vmem:[%s3 + $0xf0] sm:$0xff]
    %v492 = vld [vmem:[%s3 + $0xf8] sm:$0xff]
    %494 = vset.pattern.permute.xlu0 0
    %495 = vperm.xlu0 %494, %v461
    %v496 = vpop.permute.xlu0 %495
    %499 = vset.pattern.permute.xlu0 0
    %500 = vperm.xlu0 %499, %v462
    %v501 = vpop.permute.xlu0 %500
    %504 = vset.pattern.permute.xlu0 0
    %505 = vperm.xlu0 %504, %v463
    %v506 = vpop.permute.xlu0 %505
    %509 = vset.pattern.permute.xlu0 0
    %510 = vperm.xlu0 %509, %v464
    %v511 = vpop.permute.xlu0 %510
    %514 = vset.pattern.permute.xlu0 0
    %515 = vperm.xlu0 %514, %v465
    %v516 = vpop.permute.xlu0 %515
    %519 = vset.pattern.permute.xlu0 0
    %520 = vperm.xlu0 %519, %v466
    %v521 = vpop.permute.xlu0 %520
    %524 = vset.pattern.permute.xlu0 0
    %525 = vperm.xlu0 %524, %v467
    %v526 = vpop.permute.xlu0 %525
    %529 = vset.pattern.permute.xlu0 0
    %530 = vperm.xlu0 %529, %v468
    %v531 = vpop.permute.xlu0 %530
    %534 = vset.pattern.permute.xlu0 0
    %535 = vperm.xlu0 %534, %v469
    %v536 = vpop.permute.xlu0 %535
    %539 = vset.pattern.permute.xlu0 0
    %540 = vperm.xlu0 %539, %v470
    %v541 = vpop.permute.xlu0 %540
    %544 = vset.pattern.permute.xlu0 0
    %545 = vperm.xlu0 %544, %v471
    %v546 = vpop.permute.xlu0 %545
    %549 = vset.pattern.permute.xlu0 0
    %550 = vperm.xlu0 %549, %v472
    %v551 = vpop.permute.xlu0 %550
    %554 = vset.pattern.permute.xlu0 0
    %555 = vperm.xlu0 %554, %v473
    %v556 = vpop.permute.xlu0 %555
    %559 = vset.pattern.permute.xlu0 0
    %560 = vperm.xlu0 %559, %v474
    %v561 = vpop.permute.xlu0 %560
    %564 = vset.pattern.permute.xlu0 0
    %565 = vperm.xlu0 %564, %v475
    %v566 = vpop.permute.xlu0 %565
    %569 = vset.pattern.permute.xlu0 0
    %570 = vperm.xlu0 %569, %v476
    %v571 = vpop.permute.xlu0 %570
    %574 = vset.pattern.permute.xlu0 0
    %575 = vperm.xlu0 %574, %v477
    %v576 = vpop.permute.xlu0 %575
    %579 = vset.pattern.permute.xlu0 0
    %580 = vperm.xlu0 %579, %v478
    %v581 = vpop.permute.xlu0 %580
    %584 = vset.pattern.permute.xlu0 0
    %585 = vperm.xlu0 %584, %v479
    %v586 = vpop.permute.xlu0 %585
    %589 = vset.pattern.permute.xlu0 0
    %590 = vperm.xlu0 %589, %v480
    %v591 = vpop.permute.xlu0 %590
    %594 = vset.pattern.permute.xlu0 0
    %595 = vperm.xlu0 %594, %v481
    %v596 = vpop.permute.xlu0 %595
    %599 = vset.pattern.permute.xlu0 0
    %600 = vperm.xlu0 %599, %v482
    %v601 = vpop.permute.xlu0 %600
    %604 = vset.pattern.permute.xlu0 0
    %605 = vperm.xlu0 %604, %v483
    %v606 = vpop.permute.xlu0 %605
    %609 = vset.pattern.permute.xlu0 0
    %610 = vperm.xlu0 %609, %v484
    %v611 = vpop.permute.xlu0 %610
    %614 = vset.pattern.permute.xlu0 0
    %615 = vperm.xlu0 %614, %v485
    %v616 = vpop.permute.xlu0 %615
    %619 = vset.pattern.permute.xlu0 0
    %620 = vperm.xlu0 %619, %v486
    %v621 = vpop.permute.xlu0 %620
    %624 = vset.pattern.permute.xlu0 0
    %625 = vperm.xlu0 %624, %v487
    %v626 = vpop.permute.xlu0 %625
    %629 = vset.pattern.permute.xlu0 0
    %630 = vperm.xlu0 %629, %v488
    %v631 = vpop.permute.xlu0 %630
    %634 = vset.pattern.permute.xlu0 0
    %635 = vperm.xlu0 %634, %v489
    %v636 = vpop.permute.xlu0 %635
    %639 = vset.pattern.permute.xlu0 0
    %640 = vperm.xlu0 %639, %v490
    %v641 = vpop.permute.xlu0 %640
    %644 = vset.pattern.permute.xlu0 0
    %645 = vperm.xlu0 %644, %v491
    %v646 = vpop.permute.xlu0 %645
    %649 = vset.pattern.permute.xlu0 0
    %650 = vperm.xlu0 %649, %v492
    %v651 = vpop.permute.xlu0 %650
    %v685 = vunpack.c.l.b16 %v413
    %v686 = vunpack.c.h.b16 %v413
    %v687 = vunpack.c.l.b16 %v414
    %v688 = vunpack.c.h.b16 %v414
    %v689 = vunpack.c.l.b16 %v415
    %v690 = vunpack.c.h.b16 %v415
    %v691 = vunpack.c.l.b16 %v416
    %v692 = vunpack.c.h.b16 %v416
    %v693 = vunpack.c.l.b16 %v417
    %v694 = vunpack.c.h.b16 %v417
    %v695 = vunpack.c.l.b16 %v418
    %v696 = vunpack.c.h.b16 %v418
    %v697 = vunpack.c.l.b16 %v419
    %v698 = vunpack.c.h.b16 %v419
    %v699 = vunpack.c.l.b16 %v420
    %v700 = vunpack.c.h.b16 %v420
    %v701 = vunpack.c.l.b16 %v421
    %v702 = vunpack.c.h.b16 %v421
    %v703 = vunpack.c.l.b16 %v422
    %v704 = vunpack.c.h.b16 %v422
    %v705 = vunpack.c.l.b16 %v423
    %v706 = vunpack.c.h.b16 %v423
    %v707 = vunpack.c.l.b16 %v424
    %v708 = vunpack.c.h.b16 %v424
    %v709 = vunpack.c.l.b16 %v425
    %v710 = vunpack.c.h.b16 %v425
    %v711 = vunpack.c.l.b16 %v426
    %v712 = vunpack.c.h.b16 %v426
    %v713 = vunpack.c.l.b16 %v427
    %v714 = vunpack.c.h.b16 %v427
    %v715 = vunpack.c.l.b16 %v428
    %v716 = vunpack.c.h.b16 %v428
    %v717 = vunpack.c.l.b16 %v429
    %v718 = vunpack.c.h.b16 %v429
    %v719 = vunpack.c.l.b16 %v430
    %v720 = vunpack.c.h.b16 %v430
    %v721 = vunpack.c.l.b16 %v431
    %v722 = vunpack.c.h.b16 %v431
    %v723 = vunpack.c.l.b16 %v432
    %v724 = vunpack.c.h.b16 %v432
    %v725 = vunpack.c.l.b16 %v433
    %v726 = vunpack.c.h.b16 %v433
    %v727 = vunpack.c.l.b16 %v434
    %v728 = vunpack.c.h.b16 %v434
    %v729 = vunpack.c.l.b16 %v435
    %v730 = vunpack.c.h.b16 %v435
    %v731 = vunpack.c.l.b16 %v436
    %v732 = vunpack.c.h.b16 %v436
    %v733 = vunpack.c.l.b16 %v437
    %v734 = vunpack.c.h.b16 %v437
    %v735 = vunpack.c.l.b16 %v438
    %v736 = vunpack.c.h.b16 %v438
    %v737 = vunpack.c.l.b16 %v439
    %v738 = vunpack.c.h.b16 %v439
    %v739 = vunpack.c.l.b16 %v440
    %v740 = vunpack.c.h.b16 %v440
    %v741 = vunpack.c.l.b16 %v441
    %v742 = vunpack.c.h.b16 %v441
    %v743 = vunpack.c.l.b16 %v442
    %v744 = vunpack.c.h.b16 %v442
    %v745 = vunpack.c.l.b16 %v443
    %v746 = vunpack.c.h.b16 %v443
    %v747 = vunpack.c.l.b16 %v444
    %v748 = vunpack.c.h.b16 %v444
    %v749 = vpack.c.b16 %v687, %v685
    %v750 = vpack.c.b16 %v688, %v686
    %v751 = vpack.c.b16 %v691, %v689
    %v752 = vpack.c.b16 %v692, %v690
    %v753 = vpack.c.b16 %v695, %v693
    %v754 = vpack.c.b16 %v696, %v694
    %v755 = vpack.c.b16 %v699, %v697
    %v756 = vpack.c.b16 %v700, %v698
    %v757 = vpack.c.b16 %v703, %v701
    %v758 = vpack.c.b16 %v704, %v702
    %v759 = vpack.c.b16 %v707, %v705
    %v760 = vpack.c.b16 %v708, %v706
    %v761 = vpack.c.b16 %v711, %v709
    %v762 = vpack.c.b16 %v712, %v710
    %v763 = vpack.c.b16 %v715, %v713
    %v764 = vpack.c.b16 %v716, %v714
    %v765 = vpack.c.b16 %v719, %v717
    %v766 = vpack.c.b16 %v720, %v718
    %v767 = vpack.c.b16 %v723, %v721
    %v768 = vpack.c.b16 %v724, %v722
    %v769 = vpack.c.b16 %v727, %v725
    %v770 = vpack.c.b16 %v728, %v726
    %v771 = vpack.c.b16 %v731, %v729
    %v772 = vpack.c.b16 %v732, %v730
    %v773 = vpack.c.b16 %v735, %v733
    %v774 = vpack.c.b16 %v736, %v734
    %v775 = vpack.c.b16 %v739, %v737
    %v776 = vpack.c.b16 %v740, %v738
    %v777 = vpack.c.b16 %v743, %v741
    %v778 = vpack.c.b16 %v744, %v742
    %v779 = vpack.c.b16 %v747, %v745
    %v780 = vpack.c.b16 %v748, %v746
    %813 = vmatprep.subr.bf16.mxu0 0
    %814 = vmatpush1.bf16.msra.mxu0 %v452
    %815 = vmatprep.subr.bf16.mxu0 0
    %816 = vmatpush1.bf16.msra.mxu0 %v451
    %817 = vmatprep.subr.bf16.mxu0 0
    %818 = vmatpush1.bf16.msra.mxu0 %v450
    %819 = vmatprep.subr.bf16.mxu0 0
    %820 = vmatpush1.bf16.msra.mxu0 %v449
    %821 = vmatprep.subr.bf16.mxu0 0
    %822 = vmatpush1.bf16.msra.mxu0 %v448
    %823 = vmatprep.subr.bf16.mxu0 0
    %824 = vmatpush1.bf16.msra.mxu0 %v447
    %825 = vmatprep.subr.bf16.mxu0 0
    %826 = vmatpush1.bf16.msra.mxu0 %v446
    %827 = vmatprep.subr.bf16.mxu0 0
    %828 = vmatpush1.bf16.msra.mxu0 %v445
    %829 = vmatprep.subr.bf16.mxu0 0
    %830 = vmatpush2.bf16.msra.mxu0 %v460
    %831 = vmatprep.subr.bf16.mxu0 0
    %832 = vmatpush2.bf16.msra.mxu0 %v459
    %833 = vmatprep.subr.bf16.mxu0 0
    %834 = vmatpush2.bf16.msra.mxu0 %v458
    %835 = vmatprep.subr.bf16.mxu0 0
    %836 = vmatpush2.bf16.msra.mxu0 %v457
    %837 = vmatprep.subr.bf16.mxu0 0
    %838 = vmatpush2.bf16.msra.mxu0 %v456
    %839 = vmatprep.subr.bf16.mxu0 0
    %840 = vmatpush2.bf16.msra.mxu0 %v455
    %841 = vmatprep.subr.bf16.mxu0 0
    %842 = vmatpush2.bf16.msra.mxu0 %v454
    %843 = vmatprep.subr.bf16.mxu0 0
    %844 = vmatpush2.bf16.msra.mxu0 %v453
    %845 = vmatprep.mubr.bf16.mxu0 %v750
    %846 = vmatmul.mubr.bf16.gmra.mxu0 %v749
    %v847 = vpop.f32.mrf.mxu0
    %v848 = vadd.f32 %v496, %v847
    %v849 = vpop.f32.mrf.mxu0
    %v850 = vpop.f32.mrf.mxu0
    %v851 = vadd.f32 %v501, %v850
    %v852 = vpop.f32.mrf.mxu0
    %853 = vmatprep.mubr.bf16.mxu0 %v752
    %854 = vmatmul.mubr.bf16.gmra.mxu0 %v751
    %v855 = vpop.f32.mrf.mxu0
    %v856 = vadd.f32 %v506, %v855
    %v857 = vpop.f32.mrf.mxu0
    %v858 = vpop.f32.mrf.mxu0
    %v859 = vadd.f32 %v511, %v858
    %v860 = vpop.f32.mrf.mxu0
    %861 = vmatprep.mubr.bf16.mxu0 %v754
    %862 = vmatmul.mubr.bf16.gmra.mxu0 %v753
    %v863 = vpop.f32.mrf.mxu0
    %v864 = vadd.f32 %v516, %v863
    %v865 = vpop.f32.mrf.mxu0
    %v866 = vpop.f32.mrf.mxu0
    %v867 = vadd.f32 %v521, %v866
    %v868 = vpop.f32.mrf.mxu0
    %869 = vmatprep.mubr.bf16.mxu0 %v756
    %870 = vmatmul.mubr.bf16.gmra.mxu0 %v755
    %v871 = vpop.f32.mrf.mxu0
    %v872 = vadd.f32 %v526, %v871
    %v873 = vpop.f32.mrf.mxu0
    %v874 = vpop.f32.mrf.mxu0
    %v875 = vadd.f32 %v531, %v874
    %v876 = vpop.f32.mrf.mxu0
    %877 = vmatprep.mubr.bf16.mxu0 %v758
    %878 = vmatmul.mubr.bf16.gmra.mxu0 %v757
    %v879 = vpop.f32.mrf.mxu0
    %v880 = vadd.f32 %v536, %v879
    %v881 = vpop.f32.mrf.mxu0
    %v882 = vpop.f32.mrf.mxu0
    %v883 = vadd.f32 %v541, %v882
    %v884 = vpop.f32.mrf.mxu0
    %885 = vmatprep.mubr.bf16.mxu0 %v760
    %886 = vmatmul.mubr.bf16.gmra.mxu0 %v759
    %v887 = vpop.f32.mrf.mxu0
    %v888 = vadd.f32 %v546, %v887
    %v889 = vpop.f32.mrf.mxu0
    %v890 = vpop.f32.mrf.mxu0
    %v891 = vadd.f32 %v551, %v890
    %v892 = vpop.f32.mrf.mxu0
    %893 = vmatprep.mubr.bf16.mxu0 %v762
    %894 = vmatmul.mubr.bf16.gmra.mxu0 %v761
    %v895 = vpop.f32.mrf.mxu0
    %v896 = vadd.f32 %v556, %v895
    %v897 = vpop.f32.mrf.mxu0
    %v898 = vpop.f32.mrf.mxu0
    %v899 = vadd.f32 %v561, %v898
    %v900 = vpop.f32.mrf.mxu0
    %901 = vmatprep.mubr.bf16.mxu0 %v764
    %902 = vmatmul.mubr.bf16.gmra.mxu0 %v763
    %v903 = vpop.f32.mrf.mxu0
    %v904 = vadd.f32 %v566, %v903
    %v905 = vpop.f32.mrf.mxu0
    %v906 = vpop.f32.mrf.mxu0
    %v907 = vadd.f32 %v571, %v906
    %v908 = vpop.f32.mrf.mxu0
    %909 = vmatprep.mubr.bf16.mxu0 %v766
    %910 = vmatmul.mubr.bf16.gmra.mxu0 %v765
    %v911 = vpop.f32.mrf.mxu0
    %v912 = vadd.f32 %v576, %v911
    %v913 = vpop.f32.mrf.mxu0
    %v914 = vpop.f32.mrf.mxu0
    %v915 = vadd.f32 %v581, %v914
    %v916 = vpop.f32.mrf.mxu0
    %917 = vmatprep.mubr.bf16.mxu0 %v768
    %918 = vmatmul.mubr.bf16.gmra.mxu0 %v767
    %v919 = vpop.f32.mrf.mxu0
    %v920 = vadd.f32 %v586, %v919
    %v921 = vpop.f32.mrf.mxu0
    %v922 = vpop.f32.mrf.mxu0
    %v923 = vadd.f32 %v591, %v922
    %v924 = vpop.f32.mrf.mxu0
    %925 = vmatprep.mubr.bf16.mxu0 %v770
    %926 = vmatmul.mubr.bf16.gmra.mxu0 %v769
    %v927 = vpop.f32.mrf.mxu0
    %v928 = vadd.f32 %v596, %v927
    %v929 = vpop.f32.mrf.mxu0
    %v930 = vpop.f32.mrf.mxu0
    %v931 = vadd.f32 %v601, %v930
    %v932 = vpop.f32.mrf.mxu0
    %933 = vmatprep.mubr.bf16.mxu0 %v772
    %934 = vmatmul.mubr.bf16.gmra.mxu0 %v771
    %v935 = vpop.f32.mrf.mxu0
    %v936 = vadd.f32 %v606, %v935
    %v937 = vpop.f32.mrf.mxu0
    %v938 = vpop.f32.mrf.mxu0
    %v939 = vadd.f32 %v611, %v938
    %v940 = vpop.f32.mrf.mxu0
    %941 = vmatprep.mubr.bf16.mxu0 %v774
    %942 = vmatmul.mubr.bf16.gmra.mxu0 %v773
    %v943 = vpop.f32.mrf.mxu0
    %v944 = vadd.f32 %v616, %v943
    %v945 = vpop.f32.mrf.mxu0
    %v946 = vpop.f32.mrf.mxu0
    %v947 = vadd.f32 %v621, %v946
    %v948 = vpop.f32.mrf.mxu0
    %949 = vmatprep.mubr.bf16.mxu0 %v776
    %950 = vmatmul.mubr.bf16.gmra.mxu0 %v775
    %v951 = vpop.f32.mrf.mxu0
    %v952 = vadd.f32 %v626, %v951
    %v953 = vpop.f32.mrf.mxu0
    %v954 = vpop.f32.mrf.mxu0
    %v955 = vadd.f32 %v631, %v954
    %v956 = vpop.f32.mrf.mxu0
    %957 = vmatprep.mubr.bf16.mxu0 %v778
    %958 = vmatmul.mubr.bf16.gmra.mxu0 %v777
    %v959 = vpop.f32.mrf.mxu0
    %v960 = vadd.f32 %v636, %v959
    %v961 = vpop.f32.mrf.mxu0
    %v962 = vpop.f32.mrf.mxu0
    %v963 = vadd.f32 %v641, %v962
    %v964 = vpop.f32.mrf.mxu0
    %965 = vmatprep.mubr.bf16.mxu0 %v780
    %966 = vmatmul.mubr.bf16.gmra.mxu0 %v779
    %v967 = vpop.f32.mrf.mxu0
    %v968 = vadd.f32 %v646, %v967
    %v969 = vpop.f32.mrf.mxu0
    %v970 = vpop.f32.mrf.mxu0
    %v971 = vadd.f32 %v651, %v970
    %v972 = vpop.f32.mrf.mxu0
    %973 = vdwg.mxu0
    %v974 = vmax.f32 %v848, 0.0
    %v975 = vmax.f32 %v851, 0.0
    %v976 = vmax.f32 %v856, 0.0
    %v977 = vmax.f32 %v859, 0.0
    %v978 = vmax.f32 %v864, 0.0
    %v979 = vmax.f32 %v867, 0.0
    %v980 = vmax.f32 %v872, 0.0
    %v981 = vmax.f32 %v875, 0.0
    %v982 = vmax.f32 %v880, 0.0
    %v983 = vmax.f32 %v883, 0.0
    %v984 = vmax.f32 %v888, 0.0
    %v985 = vmax.f32 %v891, 0.0
    %v986 = vmax.f32 %v896, 0.0
    %v987 = vmax.f32 %v899, 0.0
    %v988 = vmax.f32 %v904, 0.0
    %v989 = vmax.f32 %v907, 0.0
    %v990 = vmax.f32 %v912, 0.0
    %v991 = vmax.f32 %v915, 0.0
    %v992 = vmax.f32 %v920, 0.0
    %v993 = vmax.f32 %v923, 0.0
    %v994 = vmax.f32 %v928, 0.0
    %v995 = vmax.f32 %v931, 0.0
    %v996 = vmax.f32 %v936, 0.0
    %v997 = vmax.f32 %v939, 0.0
    %v998 = vmax.f32 %v944, 0.0
    %v999 = vmax.f32 %v947, 0.0
    %v1000 = vmax.f32 %v952, 0.0
    %v1001 = vmax.f32 %v955, 0.0
    %v1002 = vmax.f32 %v960, 0.0
    %v1003 = vmax.f32 %v963, 0.0
    %v1004 = vmax.f32 %v968, 0.0
    %v1005 = vmax.f32 %v971, 0.0
    %v1006 = vld [vmem:[%s4] sm:$0xff]
    %v1007 = vld [vmem:[%s4 + $0x8] sm:$0xff]
    %v1008 = vld [vmem:[%s4 + $0x10] sm:$0xff]
    %v1009 = vld [vmem:[%s4 + $0x18] sm:$0xff]
    %v1010 = vld [vmem:[%s4 + $0x20] sm:$0xff]
    %v1011 = vld [vmem:[%s4 + $0x28] sm:$0xff]
    %v1012 = vld [vmem:[%s4 + $0x30] sm:$0xff]
    %v1013 = vld [vmem:[%s4 + $0x38] sm:$0xff]
    %v1014 = vld [vmem:[%s4 + $0x40] sm:$0xff]
    %v1015 = vld [vmem:[%s4 + $0x48] sm:$0xff]
    %v1016 = vld [vmem:[%s4 + $0x50] sm:$0xff]
    %v1017 = vld [vmem:[%s4 + $0x58] sm:$0xff]
    %v1018 = vld [vmem:[%s4 + $0x60] sm:$0xff]
    %v1019 = vld [vmem:[%s4 + $0x68] sm:$0xff]
    %v1020 = vld [vmem:[%s4 + $0x70] sm:$0xff]
    %v1021 = vld [vmem:[%s4 + $0x78] sm:$0xff]
    %v1022 = vld [vmem:[%s4 + $0x80] sm:$0xff]
    %v1023 = vld [vmem:[%s4 + $0x88] sm:$0xff]
    %v1024 = vld [vmem:[%s4 + $0x90] sm:$0xff]
    %v1025 = vld [vmem:[%s4 + $0x98] sm:$0xff]
    %v1026 = vld [vmem:[%s4 + $0xa0] sm:$0xff]
    %v1027 = vld [vmem:[%s4 + $0xa8] sm:$0xff]
    %v1028 = vld [vmem:[%s4 + $0xb0] sm:$0xff]
    %v1029 = vld [vmem:[%s4 + $0xb8] sm:$0xff]
    %v1030 = vld [vmem:[%s4 + $0xc0] sm:$0xff]
    %v1031 = vld [vmem:[%s4 + $0xc8] sm:$0xff]
    %v1032 = vld [vmem:[%s4 + $0xd0] sm:$0xff]
    %v1033 = vld [vmem:[%s4 + $0xd8] sm:$0xff]
    %v1034 = vld [vmem:[%s4 + $0xe0] sm:$0xff]
    %v1035 = vld [vmem:[%s4 + $0xe8] sm:$0xff]
    %v1036 = vld [vmem:[%s4 + $0xf0] sm:$0xff]
    %v1037 = vld [vmem:[%s4 + $0xf8] sm:$0xff]
    %1039 = vset.pattern.permute.xlu0 0
    %1040 = vperm.xlu0 %1039, %v1006
    %v1041 = vpop.permute.xlu0 %1040
    %1044 = vset.pattern.permute.xlu0 0
    %1045 = vperm.xlu0 %1044, %v1007
    %v1046 = vpop.permute.xlu0 %1045
    %1049 = vset.pattern.permute.xlu0 0
    %1050 = vperm.xlu0 %1049, %v1008
    %v1051 = vpop.permute.xlu0 %1050
    %1054 = vset.pattern.permute.xlu0 0
    %1055 = vperm.xlu0 %1054, %v1009
    %v1056 = vpop.permute.xlu0 %1055
    %1059 = vset.pattern.permute.xlu0 0
    %1060 = vperm.xlu0 %1059, %v1010
    %v1061 = vpop.permute.xlu0 %1060
    %1064 = vset.pattern.permute.xlu0 0
    %1065 = vperm.xlu0 %1064, %v1011
    %v1066 = vpop.permute.xlu0 %1065
    %1069 = vset.pattern.permute.xlu0 0
    %1070 = vperm.xlu0 %1069, %v1012
    %v1071 = vpop.permute.xlu0 %1070
    %1074 = vset.pattern.permute.xlu0 0
    %1075 = vperm.xlu0 %1074, %v1013
    %v1076 = vpop.permute.xlu0 %1075
    %1079 = vset.pattern.permute.xlu0 0
    %1080 = vperm.xlu0 %1079, %v1014
    %v1081 = vpop.permute.xlu0 %1080
    %1084 = vset.pattern.permute.xlu0 0
    %1085 = vperm.xlu0 %1084, %v1015
    %v1086 = vpop.permute.xlu0 %1085
    %1089 = vset.pattern.permute.xlu0 0
    %1090 = vperm.xlu0 %1089, %v1016
    %v1091 = vpop.permute.xlu0 %1090
    %1094 = vset.pattern.permute.xlu0 0
    %1095 = vperm.xlu0 %1094, %v1017
    %v1096 = vpop.permute.xlu0 %1095
    %1099 = vset.pattern.permute.xlu0 0
    %1100 = vperm.xlu0 %1099, %v1018
    %v1101 = vpop.permute.xlu0 %1100
    %1104 = vset.pattern.permute.xlu0 0
    %1105 = vperm.xlu0 %1104, %v1019
    %v1106 = vpop.permute.xlu0 %1105
    %1109 = vset.pattern.permute.xlu0 0
    %1110 = vperm.xlu0 %1109, %v1020
    %v1111 = vpop.permute.xlu0 %1110
    %1114 = vset.pattern.permute.xlu0 0
    %1115 = vperm.xlu0 %1114, %v1021
    %v1116 = vpop.permute.xlu0 %1115
    %1119 = vset.pattern.permute.xlu0 0
    %1120 = vperm.xlu0 %1119, %v1022
    %v1121 = vpop.permute.xlu0 %1120
    %1124 = vset.pattern.permute.xlu0 0
    %1125 = vperm.xlu0 %1124, %v1023
    %v1126 = vpop.permute.xlu0 %1125
    %1129 = vset.pattern.permute.xlu0 0
    %1130 = vperm.xlu0 %1129, %v1024
    %v1131 = vpop.permute.xlu0 %1130
    %1134 = vset.pattern.permute.xlu0 0
    %1135 = vperm.xlu0 %1134, %v1025
    %v1136 = vpop.permute.xlu0 %1135
    %1139 = vset.pattern.permute.xlu0 0
    %1140 = vperm.xlu0 %1139, %v1026
    %v1141 = vpop.permute.xlu0 %1140
    %1144 = vset.pattern.permute.xlu0 0
    %1145 = vperm.xlu0 %1144, %v1027
    %v1146 = vpop.permute.xlu0 %1145
    %1149 = vset.pattern.permute.xlu0 0
    %1150 = vperm.xlu0 %1149, %v1028
    %v1151 = vpop.permute.xlu0 %1150
    %1154 = vset.pattern.permute.xlu0 0
    %1155 = vperm.xlu0 %1154, %v1029
    %v1156 = vpop.permute.xlu0 %1155
    %1159 = vset.pattern.permute.xlu0 0
    %1160 = vperm.xlu0 %1159, %v1030
    %v1161 = vpop.permute.xlu0 %1160
    %1164 = vset.pattern.permute.xlu0 0
    %1165 = vperm.xlu0 %1164, %v1031
    %v1166 = vpop.permute.xlu0 %1165
    %1169 = vset.pattern.permute.xlu0 0
    %1170 = vperm.xlu0 %1169, %v1032
    %v1171 = vpop.permute.xlu0 %1170
    %1174 = vset.pattern.permute.xlu0 0
    %1175 = vperm.xlu0 %1174, %v1033
    %v1176 = vpop.permute.xlu0 %1175
    %1179 = vset.pattern.permute.xlu0 0
    %1180 = vperm.xlu0 %1179, %v1034
    %v1181 = vpop.permute.xlu0 %1180
    %1184 = vset.pattern.permute.xlu0 0
    %1185 = vperm.xlu0 %1184, %v1035
    %v1186 = vpop.permute.xlu0 %1185
    %1189 = vset.pattern.permute.xlu0 0
    %1190 = vperm.xlu0 %1189, %v1036
    %v1191 = vpop.permute.xlu0 %1190
    %1194 = vset.pattern.permute.xlu0 0
    %1195 = vperm.xlu0 %1194, %v1037
    %v1196 = vpop.permute.xlu0 %1195
    %v1198 = vmul.f32 %v974, %v1041
    %v1199 = vmul.f32 %v975, %v1046
    %v1200 = vmul.f32 %v976, %v1051
    %v1201 = vmul.f32 %v977, %v1056
    %v1202 = vmul.f32 %v978, %v1061
    %v1203 = vmul.f32 %v979, %v1066
    %v1204 = vmul.f32 %v980, %v1071
    %v1205 = vmul.f32 %v981, %v1076
    %v1206 = vmul.f32 %v982, %v1081
    %v1207 = vmul.f32 %v983, %v1086
    %v1208 = vmul.f32 %v984, %v1091
    %v1209 = vmul.f32 %v985, %v1096
    %v1210 = vmul.f32 %v986, %v1101
    %v1211 = vmul.f32 %v987, %v1106
    %v1212 = vmul.f32 %v988, %v1111
    %v1213 = vmul.f32 %v989, %v1116
    %v1214 = vmul.f32 %v990, %v1121
    %v1215 = vmul.f32 %v991, %v1126
    %v1216 = vmul.f32 %v992, %v1131
    %v1217 = vmul.f32 %v993, %v1136
    %v1218 = vmul.f32 %v994, %v1141
    %v1219 = vmul.f32 %v995, %v1146
    %v1220 = vmul.f32 %v996, %v1151
    %v1221 = vmul.f32 %v997, %v1156
    %v1222 = vmul.f32 %v998, %v1161
    %v1223 = vmul.f32 %v999, %v1166
    %v1224 = vmul.f32 %v1000, %v1171
    %v1225 = vmul.f32 %v1001, %v1176
    %v1226 = vmul.f32 %v1002, %v1181
    %v1227 = vmul.f32 %v1003, %v1186
    %v1228 = vmul.f32 %v1004, %v1191
    %v1229 = vmul.f32 %v1005, %v1196
    %v1230 = vadd.f32 %v1198, %v1199
    %v1231 = vadd.f32 %v1230, %v1200
    %v1232 = vadd.f32 %v1231, %v1201
    %v1233 = vadd.f32 %v1232, %v1202
    %v1234 = vadd.f32 %v1233, %v1203
    %v1235 = vadd.f32 %v1234, %v1204
    %v1236 = vadd.f32 %v1235, %v1205
    %v1237 = vadd.f32 %v1236, %v1206
    %v1238 = vadd.f32 %v1237, %v1207
    %v1239 = vadd.f32 %v1238, %v1208
    %v1240 = vadd.f32 %v1239, %v1209
    %v1241 = vadd.f32 %v1240, %v1210
    %v1242 = vadd.f32 %v1241, %v1211
    %v1243 = vadd.f32 %v1242, %v1212
    %v1244 = vadd.f32 %v1243, %v1213
    %v1245 = vadd.f32 %v1244, %v1214
    %v1246 = vadd.f32 %v1245, %v1215
    %v1247 = vadd.f32 %v1246, %v1216
    %v1248 = vadd.f32 %v1247, %v1217
    %v1249 = vadd.f32 %v1248, %v1218
    %v1250 = vadd.f32 %v1249, %v1219
    %v1251 = vadd.f32 %v1250, %v1220
    %v1252 = vadd.f32 %v1251, %v1221
    %v1253 = vadd.f32 %v1252, %v1222
    %v1254 = vadd.f32 %v1253, %v1223
    %v1255 = vadd.f32 %v1254, %v1224
    %v1256 = vadd.f32 %v1255, %v1225
    %v1257 = vadd.f32 %v1256, %v1226
    %v1258 = vadd.f32 %v1257, %v1227
    %v1259 = vadd.f32 %v1258, %v1228
    %v1260 = vadd.f32 %v1259, %v1229
    %v1261 = vrot.slane %v1260, 4
    %v1262 = vadd.f32 %v1260, %v1261
    %v1263 = vrot.slane %v1262, 2
    %v1264 = vadd.f32 %v1262, %v1263
    %v1265 = vrot.slane %v1264, 1
    %v1266 = vadd.f32 %v1264, %v1265
    %s1267 = sld [smem:[#allocation2]]
    %v1268 = vstv %s1267
    %v1269 = vadd.f32 %v1266, %v1268
    %1270 = vst [vmem:[#allocation3] sm:$0xff] %v1269
    // Predicated region
    $region26: #{tpu_custom_call.1} parent=1 // pred_check
      _
    $region27: #{tpu_custom_call.1} parent=1 // pred_check_branch
      %1272 = sbr.rel (0) target = $region29
    $region28: #{tpu_custom_call.1} parent=1 // pred_region
      %s1274 = ssub.s32 128, 128
      %1275 = vsyncadd [#allocation4], %s1274
      %s1277 = sshll.u32 [#allocation3], 4
      %s1278 = int_to_ptr.vmem [resolvable:$true] %s1277
      %1280 = dma.vmem_to_hbm [thread:$0]  %s1278, 128, %s6, [#allocation4]
    $region29: #{tpu_custom_call.1} parent=1 // pred_fallthru
      _
    // Predicated region
    $region30: #{tpu_custom_call.1} parent=1 // pred_check
      _
    $region31: #{tpu_custom_call.1} parent=1 // pred_check_branch
      %1282 = sbr.rel (0) target = $region33
    $region32: #{tpu_custom_call.1} parent=1 // pred_region
      %1283 = dma.done [#allocation4], 128
    $region33: #{tpu_custom_call.1} parent=1 // pred_fallthru
      _
    %1284 = vsyncpa [#allocation4], 1

</llo_original>
